<compile_context>
chip_gen: v7x
topology: tpu7x:2x2x1
jax: 0.10.0
libtpu: 0.0.40
codegen_flags: <defaults>
</compile_context>

<pallas_src>
import functools

import jax
import jax.numpy as jnp
from jax.experimental import pallas as pl
from jax.experimental.pallas import tpu as pltpu

EPS = 1e-5  # PyTorch nn.LayerNorm default eps


def _ln(x, g, b):
    mu = x.mean(-1, keepdims=True)
    var = ((x - mu) ** 2).mean(-1, keepdims=True)
    return (x - mu) / jnp.sqrt(var + EPS) * g + b


def cae_attentive_kernel(
    x_ref,        # (TB, Np, C)   current batch block of (padded) x_kv
    wf_ref,       # (C, AHD+H)    fused [Wv | Wlogit] with LN affines / query folded in
    he_ref,       # (H, AHD)      0/1 head-block indicator (attn -> per-dim weights)
    wp_ref,       # (AHD, C)      output projection weight
    bp_ref,       # (1, C)        output bias (proj bias + folded v bias)
    o_ref,        # (TB, C)
    *, num_heads, all_head_dim, n_valid, matmul_dtype,
):
    TB, Np, C = x_ref.shape
    AHD = all_head_dim
    H = num_heads
    md = jnp.float32 if matmul_dtype is None else matmul_dtype

    # --- shared LayerNorm statistics for k- and v-paths (affine folded into W) ---
    # Np is a multiple of 8, so this reshape is layout-free (no relayout copies).
    x = x_ref[...].reshape(TB * Np, C).astype(jnp.float32)
    mu = jnp.mean(x, axis=-1, keepdims=True)
    var = jnp.mean(jnp.square(x - mu), axis=-1, keepdims=True)
    x_hat = (x - mu) * jax.lax.rsqrt(var + EPS)                        # (TB*Np, C)

    # --- single fused projection on the MXU (f32 accumulation) ---
    fused = jnp.dot(x_hat.astype(md), wf_ref[...],
                    preferred_element_type=jnp.float32)                # (TB*Np, AHD+H)
    v = fused[:, :AHD]                                                 # (TB*Np, AHD)
    logits = fused[:, AHD:]                                            # (TB*Np, H)

    # --- single-query softmax over N, vectorized over (batch, head) ---
    lg = logits.reshape(TB, Np, H)
    m = jnp.max(lg, axis=1, keepdims=True)                             # (TB, 1, H)
    e = jnp.exp(lg - m)
    if n_valid != Np:                                                  # mask padded rows
        row = jax.lax.broadcasted_iota(jnp.int32, (TB, Np, H), 1)
        e = jnp.where(row < n_valid, e, 0.0)
    denom = jnp.sum(e, axis=1, keepdims=True)                          # (TB, 1, H)
    # exact reciprocal (tiny array): keeps sum(attn)==1 so the bv->bp fold is exact
    attn = e * pl.reciprocal(denom, approx=False)                      # (TB, Np, H)

    # broadcast per-head attention weights across head_dim via tiny 0/1 matmul,
    # then reduce the context over N (no per-head loop / lane concat).
    attn_full = jnp.dot(attn.reshape(TB * Np, H).astype(md), he_ref[...],
                        preferred_element_type=jnp.float32)            # (TB*Np, AHD)
    ctx = jnp.sum((attn_full * v).reshape(TB, Np, AHD), axis=1)        # (TB, AHD)

    # --- output projection (v-bias already folded into bp in the wrapper) ---
    y = jnp.dot(ctx.astype(md), wp_ref[...],
                preferred_element_type=jnp.float32) + bp_ref[...]
    o_ref[...] = y.astype(o_ref.dtype)


def cae_attentive_block(x_kv, query_token, params, num_heads, *,
                        block_b=None, matmul_dtype=None):
    """x_kv: (B, N, C). Returns (B, C) (== torch output.squeeze() for B > 1).

    matmul_dtype: set to jnp.bfloat16 on v5e/v6e/v7x for realistic shapes (LN /
    softmax stay f32, accumulation is f32); left None here for tight f32 checks.
    """
    B, N, C = x_kv.shape
    gq, bq, gk, bk, gv, bv, wq, wk, wv, wp, bp = params
    AHD = wq.shape[1]
    H = num_heads
    hd = AHD // H
    scale = hd ** -0.5

    # ---------- one-time, batch-independent preprocessing (hoisted) ----------
    # Query path: LN_q + q projection + scale (identical for every batch element).
    q = _ln(query_token, gq, bq) @ wq * scale                          # (1, AHD)
    # Fold LN_k / LN_v affine into the projection weights (stats stay in-kernel).
    wk_f = wk * gk.reshape(C, 1)
    wv_f = wv * gv.reshape(C, 1)
    bv_f = bv @ wv                                                     # (1, AHD)
    # Fold the shared scaled query into the k-path -> per-head logit projection.
    # (The folded logit bias is constant over N per head -> softmax no-op -> dropped.)
    w_logit = (wk_f.reshape(C, H, hd) * q.reshape(1, H, hd)).sum(-1)   # (C, H)
    # Fold the v bias past the reduce (sum(attn) == 1) into the output-proj bias.
    bp_c = bp.reshape(1, C) + bv_f @ wp                                # (1, C)
    # Fused projection weight: [Wv | Wlogit] (v first -> slice boundary at AHD).
    w_fused = jnp.concatenate([wv_f, w_logit], axis=1)                 # (C, AHD+H)
    # 0/1 head-block indicator expanding per-head attn weights across head_dim.
    head_expand = jnp.repeat(jnp.eye(H, dtype=jnp.float32), hd, axis=1)  # (H, AHD)

    wp_c = wp
    if matmul_dtype is not None:
        w_fused = w_fused.astype(matmul_dtype)
        wp_c = wp_c.astype(matmul_dtype)
        head_expand = head_expand.astype(matmul_dtype)

    # ---------- pad N to a sublane multiple so in-kernel reshapes are layout-free ----------
    Np = ((N + 7) // 8) * 8
    x_in = x_kv if Np == N else jnp.pad(x_kv, ((0, 0), (0, Np - N), (0, 0)))

    # ---------- batch blocking ----------
    if block_b is None:
        # 8 keeps the output store sublane-aligned and grid length >= 2 for B >= 16
        # (both v7x TensorCores used).  On HBM-bound v6e consider 16-32 when N is small.
        block_b = 8 if B % 8 == 0 else B
    assert B % block_b == 0, "B must be divisible by block_b"
    assert block_b % 8 == 0 or block_b == B, "block_b must be a multiple of 8 or equal B"
    grid = (B // block_b,)

    kernel = functools.partial(cae_attentive_kernel, num_heads=H, all_head_dim=AHD,
                               n_valid=N, matmul_dtype=matmul_dtype)

    # ---------- explicit VMEM budget + cost estimate ----------
    out_itemsize = jnp.dtype(x_kv.dtype).itemsize
    x_blk_bytes = 2 * block_b * Np * C * jnp.dtype(x_in.dtype).itemsize     # double-buffered
    o_blk_bytes = 2 * block_b * C * out_itemsize
    w_bytes = int(w_fused.size * w_fused.dtype.itemsize
                  + head_expand.size * head_expand.dtype.itemsize
                  + wp_c.size * wp_c.dtype.itemsize
                  + bp_c.size * bp_c.dtype.itemsize)                        # single-buffered
    interm_bytes = 4 * block_b * Np * max(C, AHD + H) * 4                   # f32 intermediates
    vmem_limit = int(min(128 * 1024 * 1024,
                         max(16 * 1024 * 1024,
                             2 * (x_blk_bytes + o_blk_bytes + w_bytes + interm_bytes)
                             + (8 << 20))))

    cost = pl.CostEstimate(
        flops=int(2 * B * Np * C * (AHD + H) + 2 * B * Np * H * AHD
                  + 2 * B * AHD * C + 10 * B * Np * C),
        transcendentals=int(B * Np * (H + 1)),
        bytes_accessed=int(x_in.size * jnp.dtype(x_in.dtype).itemsize
                           + w_bytes + B * C * out_itemsize),
    )

    # Constant weights: memory-space-only specs => brought into VMEM once for the
    # whole call (single buffer, no per-step DMA bookkeeping).
    vmem_const = pl.BlockSpec(memory_space=pltpu.MemorySpace.VMEM)

    out = pl.pallas_call(
        kernel,
        out_shape=jax.ShapeDtypeStruct((B, C), x_kv.dtype),
        grid=grid,
        in_specs=[
            pl.BlockSpec((block_b, Np, C), lambda b: (b, 0, 0)),   # x_kv batch block
            vmem_const,    # w_fused
            vmem_const,    # head_expand
            vmem_const,    # wp
            vmem_const,    # bp (proj bias + folded v bias)
        ],
        out_specs=pl.BlockSpec((block_b, C), lambda b: (b, 0)),    # lane/sublane-dense store
        compiler_params=pltpu.CompilerParams(
            dimension_semantics=("parallel",),
            vmem_limit_bytes=vmem_limit),
        cost_estimate=cost,
    )(x_in, w_fused, head_expand, wp_c, bp_c)
    return out


def reference(x_kv, query_token, params, num_heads):
    """Pure-JAX reference mirroring the PyTorch forward."""
    gq, bq, gk, bk, gv, bv, wq, wk, wv, wp, bp = params
    B, N, C = x_kv.shape
    AHD = wq.shape[1]
    hd = AHD // num_heads
    scale = hd ** -0.5

    x_q = _ln(jnp.broadcast_to(query_token[None], (B, 1, C)), gq, bq)
    x_k = _ln(x_kv, gk, bk)
    x_v = _ln(x_kv, gv, bv)
    q = (x_q @ wq).reshape(B, 1, num_heads, hd).transpose(0, 2, 1, 3) * scale
    k = (x_k @ wk).reshape(B, N, num_heads, hd).transpose(0, 2, 1, 3)
    v = (x_v @ wv).reshape(B, N, num_heads, hd).transpose(0, 2, 1, 3)
    attn = jax.nn.softmax(q @ k.transpose(0, 1, 3, 2), axis=-1)
    o = (attn @ v).transpose(0, 2, 1, 3).reshape(B, 1, AHD)
    return (o @ wp + bp)[:, 0, :]


if __name__ == "__main__":
    B, N, C = 16, 8, 32         # batch, kv sequence length, hidden dim
    num_heads = 4               # head_dim = 8
    AHD = C                     # all_head_dim == dim (attn_head_dim=None)

    key = jax.random.PRNGKey(0)
    ks = jax.random.split(key, 12)
    x_kv = jax.random.normal(ks[0], (B, N, C), jnp.float32)

    # deterministic synthetic parameters (shapes from CAEAttentiveBlock.__init__)
    query_token = 0.02 * jax.random.normal(ks[1], (1, C), jnp.float32)   # (1,1,dim) -> (1,C)
    gq = 1.0 + 0.1 * jax.random.normal(ks[2], (1, C), jnp.float32)
    bq = 0.1 * jax.random.normal(ks[3], (1, C), jnp.float32)
    gk = 1.0 + 0.1 * jax.random.normal(ks[4], (1, C), jnp.float32)
    bk = 0.1 * jax.random.normal(ks[5], (1, C), jnp.float32)
    gv = 1.0 + 0.1 * jax.random.normal(ks[6], (1, C), jnp.float32)
    bv = 0.1 * jax.random.normal(ks[7], (1, C), jnp.float32)
    # Linear weights stored pre-transposed as (in, out) so kernel does x @ W.
    wq = 0.1 * jax.random.normal(ks[8], (C, AHD), jnp.float32)
    wk = 0.1 * jax.random.normal(ks[9], (C, AHD), jnp.float32)
    wv = 0.1 * jax.random.normal(ks[10], (C, AHD), jnp.float32)
    wp = 0.1 * jax.random.normal(ks[11], (AHD, C), jnp.float32)
    bp = jnp.zeros((1, C), jnp.float32)
    params = (gq, bq, gk, bk, gv, bv, wq, wk, wv, wp, bp)

    # TODO(synk): for B == 1 torch's .squeeze() returns (C,); this wrapper keeps (B, C).
    out = cae_attentive_block(x_kv, query_token, params, num_heads)
    out = jax.block_until_ready(out)

    ref = reference(x_kv, query_token, params, num_heads)
    assert out.shape == (B, C), out.shape
    # folding is algebraically exact; tolerance only covers f32 rounding-order changes
    assert jnp.allclose(out, ref, atol=1e-3, rtol=1e-3), \
        f"max err {jnp.max(jnp.abs(out - ref))}"

    print("KERNEL_OK")
</pallas_src>

<mosaic_0001>
module attributes {stable_mosaic.version = 11 : i64} {
  func.func @cae_attentive_kernel(%arg0: i32, %arg1: memref<8x8x32xf32, #tpu.memory_space<vmem>>, %arg2: memref<32x36xf32, #tpu.memory_space<vmem>>, %arg3: memref<4x32xf32, #tpu.memory_space<vmem>>, %arg4: memref<32x32xf32, #tpu.memory_space<vmem>>, %arg5: memref<1x32xf32, #tpu.memory_space<vmem>>, %arg6: memref<8x32xf32, #tpu.memory_space<vmem>>) attributes {dimension_semantics = [#tpu.dimension_semantics<parallel>], iteration_bounds = array<i64: 2>, scalar_prefetch = 0 : i64, scratch_operands = 0 : i64, tpu.core_type = #tpu.core_type<tc>, window_params = [{transform_indices = @transform_0, window_bounds = array<i64: 8, 8, 32>}, {pipeline_mode = #tpu.pipeline_mode<synchronous>, transform_indices = @transform_1, window_bounds = array<i64: 32, 36>}, {pipeline_mode = #tpu.pipeline_mode<synchronous>, transform_indices = @transform_2, window_bounds = array<i64: 4, 32>}, {pipeline_mode = #tpu.pipeline_mode<synchronous>, transform_indices = @transform_3, window_bounds = array<i64: 32, 32>}, {pipeline_mode = #tpu.pipeline_mode<synchronous>, transform_indices = @transform_4, window_bounds = array<i64: 1, 32>}, {transform_indices = @transform_5, window_bounds = array<i64: 8, 32>}]} {
    %c0 = arith.constant 0 : index
    %c0_0 = arith.constant 0 : index
    %c0_1 = arith.constant 0 : index
    %0 = vector.load %arg1[%c0, %c0_0, %c0_1] : memref<8x8x32xf32, #tpu.memory_space<vmem>>, vector<8x8x32xf32>
    %1 = vector.shape_cast %0 : vector<8x8x32xf32> to vector<64x32xf32>
    %cst = arith.constant dense<0.000000e+00> : vector<64xf32>
    %2 = vector.multi_reduction <add>, %1, %cst [1] : vector<64x32xf32> to vector<64xf32>
    %3 = vector.shape_cast %2 : vector<64xf32> to vector<64x1xf32>
    %cst_2 = arith.constant 3.200000e+01 : f32
    %4 = vector.broadcast %cst_2 : f32 to vector<64x1xf32>
    %5 = arith.divf %3, %4 : vector<64x1xf32>
    %6 = vector.broadcast %5 : vector<64x1xf32> to vector<64x32xf32>
    %7 = arith.subf %1, %6 : vector<64x32xf32>
    %8 = arith.mulf %7, %7 : vector<64x32xf32>
    %cst_3 = arith.constant dense<0.000000e+00> : vector<64xf32>
    %9 = vector.multi_reduction <add>, %8, %cst_3 [1] : vector<64x32xf32> to vector<64xf32>
    %10 = vector.shape_cast %9 : vector<64xf32> to vector<64x1xf32>
    %cst_4 = arith.constant 3.200000e+01 : f32
    %11 = vector.broadcast %cst_4 : f32 to vector<64x1xf32>
    %12 = arith.divf %10, %11 : vector<64x1xf32>
    %13 = vector.broadcast %5 : vector<64x1xf32> to vector<64x32xf32>
    %14 = arith.subf %1, %13 : vector<64x32xf32>
    %cst_5 = arith.constant 9.99999974E-6 : f32
    %15 = vector.broadcast %cst_5 : f32 to vector<64x1xf32>
    %16 = arith.addf %12, %15 : vector<64x1xf32>
    %17 = math.rsqrt %16 : vector<64x1xf32>
    %18 = vector.broadcast %17 : vector<64x1xf32> to vector<64x32xf32>
    %19 = arith.mulf %14, %18 : vector<64x32xf32>
    %c0_6 = arith.constant 0 : index
    %c0_7 = arith.constant 0 : index
    %20 = vector.load %arg2[%c0_6, %c0_7] : memref<32x36xf32, #tpu.memory_space<vmem>>, vector<32x36xf32>
    %cst_8 = arith.constant dense<0.000000e+00> : vector<64x36xf32>
    %21 = tpu.matmul %19, %20, %cst_8 {dimension_numbers = #tpu.dot_dimension_numbers<[1], [0], [0], [1], [0, 0, 1, 1], [], []>} : vector<64x32xf32>, vector<32x36xf32>, vector<64x36xf32> -> vector<64x36xf32>
    %22 = vector.extract_strided_slice %21 {offsets = [0, 0], sizes = [64, 32], strides = [1, 1]} : vector<64x36xf32> to vector<64x32xf32>
    %23 = vector.extract_strided_slice %21 {offsets = [0, 32], sizes = [64, 4], strides = [1, 1]} : vector<64x36xf32> to vector<64x4xf32>
    %24 = vector.shape_cast %23 : vector<64x4xf32> to vector<8x8x4xf32>
    %cst_9 = arith.constant dense<0xFF800000> : vector<8x4xf32>
    %25 = vector.multi_reduction <maximumf>, %24, %cst_9 [1] : vector<8x8x4xf32> to vector<8x4xf32>
    %26 = vector.shape_cast %25 : vector<8x4xf32> to vector<8x1x4xf32>
    %27 = vector.broadcast %26 : vector<8x1x4xf32> to vector<8x8x4xf32>
    %28 = arith.subf %24, %27 : vector<8x8x4xf32>
    %29 = math.exp %28 : vector<8x8x4xf32>
    %cst_10 = arith.constant dense<0.000000e+00> : vector<8x4xf32>
    %30 = vector.multi_reduction <add>, %29, %cst_10 [1] : vector<8x8x4xf32> to vector<8x4xf32>
    %31 = vector.shape_cast %30 : vector<8x4xf32> to vector<8x1x4xf32>
    %32 = tpu.reciprocal %31 : vector<8x1x4xf32> -> vector<8x1x4xf32>
    %33 = vector.broadcast %32 : vector<8x1x4xf32> to vector<8x8x4xf32>
    %34 = arith.mulf %29, %33 : vector<8x8x4xf32>
    %35 = vector.shape_cast %34 : vector<8x8x4xf32> to vector<64x4xf32>
    %c0_11 = arith.constant 0 : index
    %c0_12 = arith.constant 0 : index
    %36 = vector.load %arg3[%c0_11, %c0_12] : memref<4x32xf32, #tpu.memory_space<vmem>>, vector<4x32xf32>
    %cst_13 = arith.constant dense<0.000000e+00> : vector<64x32xf32>
    %37 = tpu.matmul %35, %36, %cst_13 {dimension_numbers = #tpu.dot_dimension_numbers<[1], [0], [0], [1], [0, 0, 1, 1], [], []>} : vector<64x4xf32>, vector<4x32xf32>, vector<64x32xf32> -> vector<64x32xf32>
    %38 = arith.mulf %37, %22 : vector<64x32xf32>
    %39 = vector.shape_cast %38 : vector<64x32xf32> to vector<8x8x32xf32>
    %cst_14 = arith.constant dense<0.000000e+00> : vector<8x32xf32>
    %40 = vector.multi_reduction <add>, %39, %cst_14 [1] : vector<8x8x32xf32> to vector<8x32xf32>
    %c0_15 = arith.constant 0 : index
    %c0_16 = arith.constant 0 : index
    %41 = vector.load %arg4[%c0_15, %c0_16] : memref<32x32xf32, #tpu.memory_space<vmem>>, vector<32x32xf32>
    %cst_17 = arith.constant dense<0.000000e+00> : vector<8x32xf32>
    %42 = tpu.matmul %40, %41, %cst_17 {dimension_numbers = #tpu.dot_dimension_numbers<[1], [0], [0], [1], [0, 0, 1, 1], [], []>} : vector<8x32xf32>, vector<32x32xf32>, vector<8x32xf32> -> vector<8x32xf32>
    %c0_18 = arith.constant 0 : index
    %c0_19 = arith.constant 0 : index
    %43 = vector.load %arg5[%c0_18, %c0_19] : memref<1x32xf32, #tpu.memory_space<vmem>>, vector<1x32xf32>
    %44 = vector.broadcast %43 : vector<1x32xf32> to vector<8x32xf32>
    %45 = arith.addf %42, %44 : vector<8x32xf32>
    %c0_20 = arith.constant 0 : index
    %c0_21 = arith.constant 0 : index
    %46 = vector.load %arg6[%c0_20, %c0_21] : memref<8x32xf32, #tpu.memory_space<vmem>>, vector<8x32xf32>
    tpu.vector_store %arg6[%c0_20, %c0_21], %45 {strides = array<i32>} : memref<8x32xf32, #tpu.memory_space<vmem>>, vector<8x32xf32>,
    return
  }
  func.func @transform_0(%arg0: i32) -> (i32, i32, i32) {
    %c0_i32 = arith.constant 0 : i32
    %c0_i32_0 = arith.constant 0 : i32
    %c0_i32_1 = arith.constant 0 : i32
    return %arg0, %c0_i32, %c0_i32_0 : i32, i32, i32
  }
  func.func @transform_1(%arg0: i32) -> (i32, i32) {
    %c0_i32 = arith.constant 0 : i32
    %c0_i32_0 = arith.constant 0 : i32
    %c0_i32_1 = arith.constant 0 : i32
    return %c0_i32, %c0_i32_0 : i32, i32
  }
  func.func @transform_2(%arg0: i32) -> (i32, i32) {
    %c0_i32 = arith.constant 0 : i32
    %c0_i32_0 = arith.constant 0 : i32
    %c0_i32_1 = arith.constant 0 : i32
    return %c0_i32, %c0_i32_0 : i32, i32
  }
  func.func @transform_3(%arg0: i32) -> (i32, i32) {
    %c0_i32 = arith.constant 0 : i32
    %c0_i32_0 = arith.constant 0 : i32
    %c0_i32_1 = arith.constant 0 : i32
    return %c0_i32, %c0_i32_0 : i32, i32
  }
  func.func @transform_4(%arg0: i32) -> (i32, i32) {
    %c0_i32 = arith.constant 0 : i32
    %c0_i32_0 = arith.constant 0 : i32
    %c0_i32_1 = arith.constant 0 : i32
    return %c0_i32, %c0_i32_0 : i32, i32
  }
  func.func @transform_5(%arg0: i32) -> (i32, i32) {
    %c0_i32 = arith.constant 0 : i32
    %c0_i32_0 = arith.constant 0 : i32
    return %arg0, %c0_i32 : i32, i32
  }
}

</mosaic_0001>

<llo_original>
// kernel: tpu_custom_call.1
$region0: #{tpu_custom_call.1}
  #allocation0 [shape = 'u32[]', space=smem, size = 0x4, offset = 0x4, fixed_abs, tag = 'smem constant byte address 0x4 - core index']
  #allocation1 [shape = 'u32[144,128]{1,0:T(1,128)}', space=vmem, size = 0x12000, scoped, tag = 'internal scratch']
  %s0 = inlined_call_operand.hbm [shape: f32[16,8,32], index: 0, kind: input, shape index: {}]
  %s1 = inlined_call_operand.hbm [shape: f32[32,36], index: 1, kind: input, shape index: {}]
  %s2 = inlined_call_operand.vmem [shape: f32[4,32], index: 2, kind: input, shape index: {}]
  %s3 = inlined_call_operand.hbm [shape: f32[32,32], index: 3, kind: input, shape index: {}]
  %s4 = inlined_call_operand.vmem [shape: f32[1,32], index: 4, kind: input, shape index: {}]
  %s5 = inlined_call_operand.hbm [shape: f32[16,32], index: 5, kind: output, shape index: {}]
  %s6 = sld [smem:[#allocation0]]
  $region65: #{tpu_custom_call.1} parent=0
    _
  %s8 = ssub.s32 1, %s6
  %s9 = scalar_select 0, %s8, %s6
  $region1: #{tpu_custom_call.1} parent=0
    #allocation2 [shape = 'u8[65536]{0}', space=vmem, size = 0x10000, scoped, tag = 'input window, operand 0']
    #allocation3 [shape = 's32[2]{0}', space=sflag, size = 0x8, scoped, tag = 'scoped memory for tpu_custom_call.1']
    #allocation4 [shape = 's32[2]{0}', space=sflag, size = 0x8, scoped, tag = 'scoped memory for tpu_custom_call.1']
    #allocation5 [shape = 'u8[16384]{0}', space=vmem, size = 0x4000, scoped, tag = 'input window, operand 1, single buffered']
    #allocation6 [shape = 's32[1]{0}', space=sflag, size = 0x4, scoped, tag = 'scoped memory for tpu_custom_call.1']
    #allocation7 [shape = 'u8[16384]{0}', space=vmem, size = 0x4000, scoped, tag = 'input window, operand 3, single buffered']
    #allocation8 [shape = 'u8[8192]{0}', space=vmem, size = 0x2000, scoped, tag = 'output window, operand 0']
    %10 = vsyncpa [#allocation3], 0
    %s11 = scalar_lea.sflag [#allocation3], 1
    %12 = vsyncpa %s11, 0
    %13 = vsyncpa [#allocation6], 0
    %14 = vsyncpa [#allocation4], 0
    %s15 = scalar_lea.sflag [#allocation4], 1
    %16 = vsyncpa %s15, 0
    loop: start=0, step=1, limit=4
    $region2: #{tpu_custom_call.1} parent=1 // loop_pre_header
      _
    $region3: #{tpu_custom_call.1} parent=1 // loop_header
      %s18 = sphi 0, %s22
      %p19 = scmp.ge.s32.totalorder %s18, 4
      %s28 = sphi 0, %s30
      %s31 = sphi 0, %s28
      %s32 = sphi 0, %s31
      %s48 = sphi 0, %s32
      %s52 = sphi 0, %s52
      %s54 = sphi 0, %s52
      %s55 = sphi 0, %s54
      %s69 = sphi 0, %s55
      %s73 = sphi 0, %s73
      %s75 = sphi 0, %s73
      %s76 = sphi 0, %s75
      %s90 = sphi 0, %s76
      %s94 = sphi 0, %s94
      %s96 = sphi 0, %s94
      %s97 = sphi 0, %s96
      %s111 = sphi 0, %s97
      %s115 = sphi 0, %s115
      %s117 = sphi 0, %s115
      %s118 = sphi 0, %s117
      %s132 = sphi 0, %s118
      %s138 = sphi 0, %s140
      %s141 = sphi 0, %s138
      %s142 = sphi 0, %s141
      %s158 = sphi 0, %s142
    $region4: #{tpu_custom_call.1} parent=1 // loop_header_branch
      %21 = sbr.rel (%p19) target = $region8
    $region5: #{tpu_custom_call.1} parent=1 // loop_body
      %s23 = ssub.s32 %s18, 1
      %s24 = ssub.s32 %s18, 2
      %s25 = sadd.s32 %s18, 1
      %s26 = ssub.s32 %s18, %s25
      %p27 = scmp.eq.s32.totalorder %s26, 0
      %s29 = sadd.s32 %s28, 1
      %s30 = scalar_select %p27, %s28, %s29
      %p33 = pneg %p27
      %p34 = scmp.eq.s32.totalorder %s18, 1
      %p35 = por %p33, %p34
      %p36 = scmp.ne.s32.totalorder %s28, %s31
      %p37 = scmp.eq.s32.totalorder %s18, 0
      %p38 = por %p36, %p37
      %p39 = scmp.ne.s32.totalorder %s28, %s31
      %p40 = scmp.eq.s32.totalorder %s23, 1
      %p41 = por %p39, %p40
      %p42 = scmp.ne.s32.totalorder %s31, %s32
      %p43 = scmp.eq.s32.totalorder %s23, 0
      %p44 = por %p42, %p43
      %p45 = scmp.ne.s32.totalorder %s31, %s32
      %p46 = scmp.eq.s32.totalorder %s24, 1
      %p47 = por %p45, %p46
      %p49 = scmp.ne.s32.totalorder %s32, %s48
      %p50 = scmp.eq.s32.totalorder %s24, 0
      %p51 = por %p49, %p50
      %s53 = sadd.s32 %s52, 1
      %p56 = scmp.eq.s32.totalorder %s18, 1
      %p57 = scmp.ne.s32.totalorder %s52, %s54
      %p58 = scmp.eq.s32.totalorder %s18, 0
      %p59 = por %p57, %p58
      %p60 = scmp.ne.s32.totalorder %s52, %s54
      %p61 = scmp.eq.s32.totalorder %s23, 1
      %p62 = por %p60, %p61
      %p63 = scmp.ne.s32.totalorder %s54, %s55
      %p64 = scmp.eq.s32.totalorder %s23, 0
      %p65 = por %p63, %p64
      %p66 = scmp.ne.s32.totalorder %s54, %s55
      %p67 = scmp.eq.s32.totalorder %s24, 1
      %p68 = por %p66, %p67
      %p70 = scmp.ne.s32.totalorder %s55, %s69
      %p71 = scmp.eq.s32.totalorder %s24, 0
      %p72 = por %p70, %p71
      %s74 = sadd.s32 %s73, 1
      %p77 = scmp.eq.s32.totalorder %s18, 1
      %p78 = scmp.ne.s32.totalorder %s73, %s75
      %p79 = scmp.eq.s32.totalorder %s18, 0
      %p80 = por %p78, %p79
      %p81 = scmp.ne.s32.totalorder %s73, %s75
      %p82 = scmp.eq.s32.totalorder %s23, 1
      %p83 = por %p81, %p82
      %p84 = scmp.ne.s32.totalorder %s75, %s76
      %p85 = scmp.eq.s32.totalorder %s23, 0
      %p86 = por %p84, %p85
      %p87 = scmp.ne.s32.totalorder %s75, %s76
      %p88 = scmp.eq.s32.totalorder %s24, 1
      %p89 = por %p87, %p88
      %p91 = scmp.ne.s32.totalorder %s76, %s90
      %p92 = scmp.eq.s32.totalorder %s24, 0
      %p93 = por %p91, %p92
      %s95 = sadd.s32 %s94, 1
      %p98 = scmp.eq.s32.totalorder %s18, 1
      %p99 = scmp.ne.s32.totalorder %s94, %s96
      %p100 = scmp.eq.s32.totalorder %s18, 0
      %p101 = por %p99, %p100
      %p102 = scmp.ne.s32.totalorder %s94, %s96
      %p103 = scmp.eq.s32.totalorder %s23, 1
      %p104 = por %p102, %p103
      %p105 = scmp.ne.s32.totalorder %s96, %s97
      %p106 = scmp.eq.s32.totalorder %s23, 0
      %p107 = por %p105, %p106
      %p108 = scmp.ne.s32.totalorder %s96, %s97
      %p109 = scmp.eq.s32.totalorder %s24, 1
      %p110 = por %p108, %p109
      %p112 = scmp.ne.s32.totalorder %s97, %s111
      %p113 = scmp.eq.s32.totalorder %s24, 0
      %p114 = por %p112, %p113
      %s116 = sadd.s32 %s115, 1
      %p119 = scmp.eq.s32.totalorder %s18, 1
      %p120 = scmp.ne.s32.totalorder %s115, %s117
      %p121 = scmp.eq.s32.totalorder %s18, 0
      %p122 = por %p120, %p121
      %p123 = scmp.ne.s32.totalorder %s115, %s117
      %p124 = scmp.eq.s32.totalorder %s23, 1
      %p125 = por %p123, %p124
      %p126 = scmp.ne.s32.totalorder %s117, %s118
      %p127 = scmp.eq.s32.totalorder %s23, 0
      %p128 = por %p126, %p127
      %p129 = scmp.ne.s32.totalorder %s117, %s118
      %p130 = scmp.eq.s32.totalorder %s24, 1
      %p131 = por %p129, %p130
      %p133 = scmp.ne.s32.totalorder %s118, %s132
      %p134 = scmp.eq.s32.totalorder %s24, 0
      %p135 = por %p133, %p134
      %s136 = ssub.s32 %s18, %s25
      %p137 = scmp.eq.s32.totalorder %s136, 0
      %s139 = sadd.s32 %s138, 1
      %s140 = scalar_select %p137, %s138, %s139
      %p143 = pneg %p137
      %p144 = scmp.eq.s32.totalorder %s18, 1
      %p145 = por %p143, %p144
      %p146 = scmp.ne.s32.totalorder %s138, %s141
      %p147 = scmp.eq.s32.totalorder %s18, 0
      %p148 = por %p146, %p147
      %p149 = scmp.ne.s32.totalorder %s138, %s141
      %p150 = scmp.eq.s32.totalorder %s23, 1
      %p151 = por %p149, %p150
      %p152 = scmp.ne.s32.totalorder %s141, %s142
      %p153 = scmp.eq.s32.totalorder %s23, 0
      %p154 = por %p152, %p153
      %p155 = scmp.ne.s32.totalorder %s141, %s142
      %p156 = scmp.eq.s32.totalorder %s24, 1
      %p157 = por %p155, %p156
      %p159 = scmp.ne.s32.totalorder %s142, %s158
      %p160 = scmp.eq.s32.totalorder %s24, 0
      %p161 = por %p159, %p160
      %p162 = scmp.le.s32.totalorder 1, %s18
      %p163 = scmp.lt.s32.totalorder %s18, 3
      %p164 = pnand %p162, %p163
      %p165 = pneg %p164
      // Predicated region
      $region9: #{tpu_custom_call.1} parent=5 // pred_check
        _
      $region10: #{tpu_custom_call.1} parent=5 // pred_check_branch
        %167 = sbr.rel (%p164) target = $region12
      $region11: #{tpu_custom_call.1} parent=5 // pred_region
        %s168 = ssub.s32 %s18, 1
        // Predicated region
        $region13: #{tpu_custom_call.1} parent=11 // pred_check
          %p169 = pneg %p65
        $region14: #{tpu_custom_call.1} parent=11 // pred_check_branch
          %171 = sbr.rel (%p169) target = $region16
        $region15: #{tpu_custom_call.1} parent=11 // pred_region
          %s173 = ssub.s32 512, 512
          %174 = vsyncadd [#allocation6], %s173
          %s175 = sshll.u32 [#allocation5], 4
          %s176 = int_to_ptr.vmem [resolvable:$true] %s175
          %181 = dma.hbm_to_vmem [thread:$0]  %s1, 512, %s176, [#allocation6], 128, 128, 8
        $region16: #{tpu_custom_call.1} parent=11 // pred_fallthru
          _
        // Predicated region
        $region17: #{tpu_custom_call.1} parent=11 // pred_check
          %p182 = pneg %p86
        $region18: #{tpu_custom_call.1} parent=11 // pred_check_branch
          %184 = sbr.rel (%p182) target = $region20
        $region19: #{tpu_custom_call.1} parent=11 // pred_region
          _
        $region20: #{tpu_custom_call.1} parent=11 // pred_fallthru
          _
        // Predicated region
        $region21: #{tpu_custom_call.1} parent=11 // pred_check
          %p185 = pneg %p107
        $region22: #{tpu_custom_call.1} parent=11 // pred_check_branch
          %187 = sbr.rel (%p185) target = $region24
        $region23: #{tpu_custom_call.1} parent=11 // pred_region
          %s189 = ssub.s32 512, 512
          %190 = vsyncadd [#allocation6], %s189
          %s191 = sshll.u32 [#allocation7], 4
          %s192 = int_to_ptr.vmem [resolvable:$true] %s191
          %197 = dma.hbm_to_vmem [thread:$0]  %s3, 512, %s192, [#allocation6], 128, 128, 8
        $region24: #{tpu_custom_call.1} parent=11 // pred_fallthru
          _
        // Predicated region
        $region25: #{tpu_custom_call.1} parent=11 // pred_check
          %p198 = pneg %p128
        $region26: #{tpu_custom_call.1} parent=11 // pred_check_branch
          %200 = sbr.rel (%p198) target = $region28
        $region27: #{tpu_custom_call.1} parent=11 // pred_region
          _
        $region28: #{tpu_custom_call.1} parent=11 // pred_fallthru
          _
      $region12: #{tpu_custom_call.1} parent=5 // pred_fallthru
        _
      %p201 = scmp.lt.s32.totalorder %s18, 2
      // Predicated region
      $region29: #{tpu_custom_call.1} parent=5 // pred_check
        %p202 = pneg %p201
      $region30: #{tpu_custom_call.1} parent=5 // pred_check_branch
        %204 = sbr.rel (%p202) target = $region32
      $region31: #{tpu_custom_call.1} parent=5 // pred_region
        // Predicated region
        $region33: #{tpu_custom_call.1} parent=31 // pred_check
          %p205 = pneg %p38
        $region34: #{tpu_custom_call.1} parent=31 // pred_check_branch
          %207 = sbr.rel (%p205) target = $region36
        $region35: #{tpu_custom_call.1} parent=31 // pred_region
          %s208 = sand.u32 %s28, 1
          %s209 = scalar_lea.sflag [#allocation3], %s208
          %s210 = sand.u32 %s28, 1
          %s211 = smul.addr %s210, 64
          %s212 = scalar_lea.vmem [#allocation2], %s211
          %s213 = smul.u32 8, %s18
          %s215 = ssub.s32 1024, 1024
          %216 = vsyncadd %s209, %s215
          %s217 = smul.addr %s213, 128
          %s218 = scalar_lea.hbm %s0, %s217
          %s219 = sshll.u32 %s212, 4
          %s220 = int_to_ptr.vmem [resolvable:$true] %s219
          %225 = dma.hbm_to_vmem [thread:$0]  %s218, 1024, %s220, %s209, 128, 128, 8
        $region36: #{tpu_custom_call.1} parent=31 // pred_fallthru
          _
      $region32: #{tpu_custom_call.1} parent=5 // pred_fallthru
        _
      %p226 = scmp.le.s32.totalorder 1, %s18
      %p227 = scmp.lt.s32.totalorder %s18, 3
      %p228 = pnand %p226, %p227
      %p229 = pneg %p228
      // Predicated region
      $region37: #{tpu_custom_call.1} parent=5 // pred_check
        _
      $region38: #{tpu_custom_call.1} parent=5 // pred_check_branch
        %231 = sbr.rel (%p228) target = $region40
      $region39: #{tpu_custom_call.1} parent=5 // pred_region
        %s232 = ssub.s32 %s18, 1
        %s233 = sand.u32 %s31, 1
        %s234 = scalar_lea.sflag [#allocation3], %s233
        %s235 = sand.u32 %s31, 1
        %s236 = smul.addr %s235, 64
        %s237 = scalar_lea.vmem [#allocation2], %s236
        // Predicated region
        $region41: #{tpu_custom_call.1} parent=39 // pred_check
          %p238 = pneg %p44
        $region42: #{tpu_custom_call.1} parent=39 // pred_check_branch
          %240 = sbr.rel (%p238) target = $region44
        $region43: #{tpu_custom_call.1} parent=39 // pred_region
          %241 = dma.done %s234, 1024
        $region44: #{tpu_custom_call.1} parent=39 // pred_fallthru
          _
        // Predicated region
        $region45: #{tpu_custom_call.1} parent=39 // pred_check
          %p242 = pneg %p65
        $region46: #{tpu_custom_call.1} parent=39 // pred_check_branch
          %244 = sbr.rel (%p242) target = $region48
        $region47: #{tpu_custom_call.1} parent=39 // pred_region
          %245 = dma.done [#allocation6], 512
        $region48: #{tpu_custom_call.1} parent=39 // pred_fallthru
          _
        // Predicated region
        $region49: #{tpu_custom_call.1} parent=39 // pred_check
          %p246 = pneg %p107
        $region50: #{tpu_custom_call.1} parent=39 // pred_check_branch
          %248 = sbr.rel (%p246) target = $region52
        $region51: #{tpu_custom_call.1} parent=39 // pred_region
          %249 = dma.done [#allocation6], 512
        $region52: #{tpu_custom_call.1} parent=39 // pred_fallthru
          _
        %s250 = sand.u32 %s31, 1
        %s251 = scalar_lea.sflag [#allocation3], %s250
        %s252 = sand.u32 %s31, 1
        %s253 = smul.addr %s252, 64
        %s254 = scalar_lea.vmem [#allocation2], %s253
        %p255 = pneg %p44
        %p256 = pneg %p41
        %p257 = pneg %p65
        %p258 = pneg %p62
        %p259 = pneg %p86
        %p260 = pneg %p83
        %p261 = pneg %p107
        %p262 = pneg %p104
        %p263 = pneg %p128
        %p264 = pneg %p125
        %p265 = pneg %p154
        %p266 = pneg %p151
        %s267 = sand.u32 %s141, 1
        %s268 = scalar_lea.sflag [#allocation4], %s267
        %s269 = sand.u32 %s141, 1
        %s270 = smul.addr %s269, 8
        %s271 = scalar_lea.vmem [#allocation8], %s270
        %s272 = smul.u32 8, %s23
        %v273 = vld [vmem:[%s237] sm:$0xff]
        %v274 = vld [vmem:[%s237 + $0x8] sm:$0xff]
        %v275 = vld [vmem:[%s237 + $0x10] sm:$0xff]
        %v276 = vld [vmem:[%s237 + $0x18] sm:$0xff]
        %v277 = vld [vmem:[%s237 + $0x20] sm:$0xff]
        %v278 = vld [vmem:[%s237 + $0x28] sm:$0xff]
        %v279 = vld [vmem:[%s237 + $0x30] sm:$0xff]
        %v280 = vld [vmem:[%s237 + $0x38] sm:$0xff]
        %vm281 = vcmask 261120
        %v282 = vsel %vm281, %v273, 0.0
        %283 = vadd.xlane.f32.xlu0 %v282
        %v284 = vpop.xlane.xlu0 %283
        %v285 = vsel %vm281, %v274, 0.0
        %286 = vadd.xlane.f32.xlu0 %v285
        %v287 = vpop.xlane.xlu0 %286
        %v288 = vsel %vm281, %v275, 0.0
        %289 = vadd.xlane.f32.xlu0 %v288
        %v290 = vpop.xlane.xlu0 %289
        %v291 = vsel %vm281, %v276, 0.0
        %292 = vadd.xlane.f32.xlu0 %v291
        %v293 = vpop.xlane.xlu0 %292
        %v294 = vsel %vm281, %v277, 0.0
        %295 = vadd.xlane.f32.xlu0 %v294
        %v296 = vpop.xlane.xlu0 %295
        %v297 = vsel %vm281, %v278, 0.0
        %298 = vadd.xlane.f32.xlu0 %v297
        %v299 = vpop.xlane.xlu0 %298
        %v300 = vsel %vm281, %v279, 0.0
        %301 = vadd.xlane.f32.xlu0 %v300
        %v302 = vpop.xlane.xlu0 %301
        %v303 = vsel %vm281, %v280, 0.0
        %304 = vadd.xlane.f32.xlu0 %v303
        %v305 = vpop.xlane.xlu0 %304
        %v306 = vrcp.pop 32.0
        %v307 = vmul.f32 %v284, %v306
        %v308 = vmul.f32 %v287, %v306
        %v309 = vmul.f32 %v290, %v306
        %v310 = vmul.f32 %v293, %v306
        %v311 = vmul.f32 %v296, %v306
        %v312 = vmul.f32 %v299, %v306
        %v313 = vmul.f32 %v302, %v306
        %v314 = vmul.f32 %v305, %v306
        %v315 = vsub.f32 %v273, %v307
        %v316 = vsub.f32 %v274, %v308
        %v317 = vsub.f32 %v275, %v309
        %v318 = vsub.f32 %v276, %v310
        %v319 = vsub.f32 %v277, %v311
        %v320 = vsub.f32 %v278, %v312
        %v321 = vsub.f32 %v279, %v313
        %v322 = vsub.f32 %v280, %v314
        %v323 = vmul.f32 %v315, %v315
        %v324 = vmul.f32 %v316, %v316
        %v325 = vmul.f32 %v317, %v317
        %v326 = vmul.f32 %v318, %v318
        %v327 = vmul.f32 %v319, %v319
        %v328 = vmul.f32 %v320, %v320
        %v329 = vmul.f32 %v321, %v321
        %v330 = vmul.f32 %v322, %v322
        %v331 = vsel %vm281, %v323, 0.0
        %332 = vadd.xlane.f32.xlu0 %v331
        %v333 = vpop.xlane.xlu0 %332
        %v334 = vsel %vm281, %v324, 0.0
        %335 = vadd.xlane.f32.xlu0 %v334
        %v336 = vpop.xlane.xlu0 %335
        %v337 = vsel %vm281, %v325, 0.0
        %338 = vadd.xlane.f32.xlu0 %v337
        %v339 = vpop.xlane.xlu0 %338
        %v340 = vsel %vm281, %v326, 0.0
        %341 = vadd.xlane.f32.xlu0 %v340
        %v342 = vpop.xlane.xlu0 %341
        %v343 = vsel %vm281, %v327, 0.0
        %344 = vadd.xlane.f32.xlu0 %v343
        %v345 = vpop.xlane.xlu0 %344
        %v346 = vsel %vm281, %v328, 0.0
        %347 = vadd.xlane.f32.xlu0 %v346
        %v348 = vpop.xlane.xlu0 %347
        %v349 = vsel %vm281, %v329, 0.0
        %350 = vadd.xlane.f32.xlu0 %v349
        %v351 = vpop.xlane.xlu0 %350
        %v352 = vsel %vm281, %v330, 0.0
        %353 = vadd.xlane.f32.xlu0 %v352
        %v354 = vpop.xlane.xlu0 %353
        %v355 = vmul.f32 %v333, %v306
        %v356 = vmul.f32 %v336, %v306
        %v357 = vmul.f32 %v339, %v306
        %v358 = vmul.f32 %v342, %v306
        %v359 = vmul.f32 %v345, %v306
        %v360 = vmul.f32 %v348, %v306
        %v361 = vmul.f32 %v351, %v306
        %v362 = vmul.f32 %v354, %v306
        %v363 = vadd.f32 %v355, 1e-05
        %v364 = vadd.f32 %v356, 1e-05
        %v365 = vadd.f32 %v357, 1e-05
        %v366 = vadd.f32 %v358, 1e-05
        %v367 = vadd.f32 %v359, 1e-05
        %v368 = vadd.f32 %v360, 1e-05
        %v369 = vadd.f32 %v361, 1e-05
        %v370 = vadd.f32 %v362, 1e-05
        %v371 = vrsqrt.pop %v363
        %v372 = vrsqrt.pop %v364
        %v373 = vrsqrt.pop %v365
        %v374 = vrsqrt.pop %v366
        %v375 = vrsqrt.pop %v367
        %v376 = vrsqrt.pop %v368
        %v377 = vrsqrt.pop %v369
        %v378 = vrsqrt.pop %v370
        %v379 = vmul.f32 %v315, %v371
        %v380 = vmul.f32 %v316, %v372
        %v381 = vmul.f32 %v317, %v373
        %v382 = vmul.f32 %v318, %v374
        %v383 = vmul.f32 %v319, %v375
        %v384 = vmul.f32 %v320, %v376
        %v385 = vmul.f32 %v321, %v377
        %v386 = vmul.f32 %v322, %v378
        %v387 = vld [vmem:[#allocation5] sm:$0xff]
        %v388 = vld [vmem:[#allocation5 + $0x8] sm:$0xff]
        %v389 = vld [vmem:[#allocation5 + $0x10] sm:$0xff]
        %v390 = vld [vmem:[#allocation5 + $0x18] sm:$0xff]
        %v392 = vsel %vm281, %v379, 0
        %v395 = vsel %vm281, %v380, 0
        %v398 = vsel %vm281, %v381, 0
        %v401 = vsel %vm281, %v382, 0
        %v404 = vsel %vm281, %v383, 0
        %v407 = vsel %vm281, %v384, 0
        %v410 = vsel %vm281, %v385, 0
        %v413 = vsel %vm281, %v386, 0
        %415 = vmatprep.subr.mxu0 0.0
        %416 = vmatpush1.msra.mxu0 %v387
        %417 = vmatprep.subr.mxu0 0.0
        %418 = vmatpush1.msra.mxu0 %v388
        %419 = vmatprep.subr.mxu0 0.0
        %420 = vmatpush1.msra.mxu0 %v389
        %421 = vmatprep.subr.mxu0 0.0
        %422 = vmatpush1.msra.mxu0 %v390
        %423 = vmatprep.subr.mxu0 0.0
        %424 = vmatpush1.msra.mxu0 0.0
        %425 = vmatprep.subr.mxu0 0.0
        %426 = vmatpush1.msra.mxu0 0.0
        %427 = vmatprep.subr.mxu0 0.0
        %428 = vmatpush1.msra.mxu0 0.0
        %429 = vmatprep.subr.mxu0 0.0
        %430 = vmatpush1.msra.mxu0 0.0
        %431 = vmatprep.subr.mxu0 0.0
        %432 = vmatpush1.msra.mxu0 0.0
        %433 = vmatprep.subr.mxu0 0.0
        %434 = vmatpush1.msra.mxu0 0.0
        %435 = vmatprep.subr.mxu0 0.0
        %436 = vmatpush1.msra.mxu0 0.0
        %437 = vmatprep.subr.mxu0 0.0
        %438 = vmatpush1.msra.mxu0 0.0
        %439 = vmatprep.subr.mxu0 0.0
        %440 = vmatpush1.msra.mxu0 0.0
        %441 = vmatprep.subr.mxu0 0.0
        %442 = vmatpush1.msra.mxu0 0.0
        %443 = vmatprep.subr.mxu0 0.0
        %444 = vmatpush1.msra.mxu0 0.0
        %445 = vmatprep.subr.mxu0 0.0
        %446 = vmatpush1.msra.mxu0 0.0
        %447 = vmatprep.subr.mxu0 0.0
        %448 = vmatpush1.msra.mxu0 0.0
        %449 = vmatprep.subr.mxu0 0.0
        %450 = vmatpush1.msra.mxu0 0.0
        %451 = vmatprep.subr.mxu0 0.0
        %452 = vmatpush1.msra.mxu0 0.0
        %453 = vmatprep.subr.mxu0 0.0
        %454 = vmatpush1.msra.mxu0 0.0
        %455 = vmatprep.subr.mxu0 0.0
        %456 = vmatpush1.msra.mxu0 0.0
        %457 = vmatprep.subr.mxu0 0.0
        %458 = vmatpush1.msra.mxu0 0.0
        %459 = vmatprep.subr.mxu0 0.0
        %460 = vmatpush1.msra.mxu0 0.0
        %461 = vmatprep.subr.mxu0 0.0
        %462 = vmatpush1.msra.mxu0 0.0
        %463 = vmatprep.subr.mxu0 0.0
        %464 = vmatpush1.msra.mxu0 0.0
        %465 = vmatprep.subr.mxu0 0.0
        %466 = vmatpush1.msra.mxu0 0.0
        %467 = vmatprep.subr.mxu0 0.0
        %468 = vmatpush1.msra.mxu0 0.0
        %469 = vmatprep.subr.mxu0 0.0
        %470 = vmatpush1.msra.mxu0 0.0
        %471 = vmatprep.subr.mxu0 0.0
        %472 = vmatpush1.msra.mxu0 0.0
        %473 = vmatprep.subr.mxu0 0.0
        %474 = vmatpush1.msra.mxu0 0.0
        %475 = vmatprep.subr.mxu0 0.0
        %476 = vmatpush1.msra.mxu0 0.0
        %477 = vmatprep.subr.mxu0 0.0
        %478 = vmatpush1.msra.mxu0 0.0
        %479 = vmatprep.mubr.f32.mxu0 0.0
        %480 = vmatmul.mubr.f32.gmra.mrb[0].mxu0 %v392
        %v481 = vpop.f32.mrb[0].mxu0
        %v482 = vadd.f32 0.0, %v481
        %v483 = vpop.f32.mrb[0].mxu0
        %484 = vmatprep.mubr.f32.mxu0 0.0
        %485 = vmatmul.mubr.f32.gmra.mrb[0].mxu0 %v395
        %v486 = vpop.f32.mrb[0].mxu0
        %v487 = vadd.f32 0.0, %v486
        %v488 = vpop.f32.mrb[0].mxu0
        %489 = vmatprep.mubr.f32.mxu0 0.0
        %490 = vmatmul.mubr.f32.gmra.mrb[0].mxu0 %v398
        %v491 = vpop.f32.mrb[0].mxu0
        %v492 = vadd.f32 0.0, %v491
        %v493 = vpop.f32.mrb[0].mxu0
        %494 = vmatprep.mubr.f32.mxu0 0.0
        %495 = vmatmul.mubr.f32.gmra.mrb[0].mxu0 %v401
        %v496 = vpop.f32.mrb[0].mxu0
        %v497 = vadd.f32 0.0, %v496
        %v498 = vpop.f32.mrb[0].mxu0
        %499 = vmatprep.mubr.f32.mxu0 0.0
        %500 = vmatmul.mubr.f32.gmra.mrb[0].mxu0 %v404
        %v501 = vpop.f32.mrb[0].mxu0
        %v502 = vadd.f32 0.0, %v501
        %v503 = vpop.f32.mrb[0].mxu0
        %504 = vmatprep.mubr.f32.mxu0 0.0
        %505 = vmatmul.mubr.f32.gmra.mrb[0].mxu0 %v407
        %v506 = vpop.f32.mrb[0].mxu0
        %v507 = vadd.f32 0.0, %v506
        %v508 = vpop.f32.mrb[0].mxu0
        %509 = vmatprep.mubr.f32.mxu0 0.0
        %510 = vmatmul.mubr.f32.gmra.mrb[0].mxu0 %v410
        %v511 = vpop.f32.mrb[0].mxu0
        %v512 = vadd.f32 0.0, %v511
        %v513 = vpop.f32.mrb[0].mxu0
        %514 = vmatprep.mubr.f32.mxu0 0.0
        %515 = vmatmul.mubr.f32.gmra.mrb[0].mxu0 %v413
        %v516 = vpop.f32.mrb[0].mxu0
        %v517 = vadd.f32 0.0, %v516
        %v518 = vpop.f32.mrb[0].mxu0
        %519 = vdwg.mxu0
        %vm520 = vcmask 294144
        %v521 = vsel %vm520, %v482, -inf
        %v522 = vrot.slane %v521, 4
        %v523 = vmax.f32 %v521, %v522
        %v524 = vrot.slane %v523, 2
        %v525 = vmax.f32 %v523, %v524
        %v526 = vrot.slane %v525, 1
        %v527 = vmax.f32 %v525, %v526
        %v528 = vsel %vm520, %v487, -inf
        %v529 = vrot.slane %v528, 4
        %v530 = vmax.f32 %v528, %v529
        %v531 = vrot.slane %v530, 2
        %v532 = vmax.f32 %v530, %v531
        %v533 = vrot.slane %v532, 1
        %v534 = vmax.f32 %v532, %v533
        %v535 = vsel %vm520, %v492, -inf
        %v536 = vrot.slane %v535, 4
        %v537 = vmax.f32 %v535, %v536
        %v538 = vrot.slane %v537, 2
        %v539 = vmax.f32 %v537, %v538
        %v540 = vrot.slane %v539, 1
        %v541 = vmax.f32 %v539, %v540
        %v542 = vsel %vm520, %v497, -inf
        %v543 = vrot.slane %v542, 4
        %v544 = vmax.f32 %v542, %v543
        %v545 = vrot.slane %v544, 2
        %v546 = vmax.f32 %v544, %v545
        %v547 = vrot.slane %v546, 1
        %v548 = vmax.f32 %v546, %v547
        %v549 = vsel %vm520, %v502, -inf
        %v550 = vrot.slane %v549, 4
        %v551 = vmax.f32 %v549, %v550
        %v552 = vrot.slane %v551, 2
        %v553 = vmax.f32 %v551, %v552
        %v554 = vrot.slane %v553, 1
        %v555 = vmax.f32 %v553, %v554
        %v556 = vsel %vm520, %v507, -inf
        %v557 = vrot.slane %v556, 4
        %v558 = vmax.f32 %v556, %v557
        %v559 = vrot.slane %v558, 2
        %v560 = vmax.f32 %v558, %v559
        %v561 = vrot.slane %v560, 1
        %v562 = vmax.f32 %v560, %v561
        %v563 = vsel %vm520, %v512, -inf
        %v564 = vrot.slane %v563, 4
        %v565 = vmax.f32 %v563, %v564
        %v566 = vrot.slane %v565, 2
        %v567 = vmax.f32 %v565, %v566
        %v568 = vrot.slane %v567, 1
        %v569 = vmax.f32 %v567, %v568
        %v570 = vsel %vm520, %v517, -inf
        %v571 = vrot.slane %v570, 4
        %v572 = vmax.f32 %v570, %v571
        %v573 = vrot.slane %v572, 2
        %v574 = vmax.f32 %v572, %v573
        %v575 = vrot.slane %v574, 1
        %v576 = vmax.f32 %v574, %v575
        %v577 = vsub.f32 %v482, %v527
        %v578 = vsub.f32 %v487, %v534
        %v579 = vsub.f32 %v492, %v541
        %v580 = vsub.f32 %v497, %v548
        %v581 = vsub.f32 %v502, %v555
        %v582 = vsub.f32 %v507, %v562
        %v583 = vsub.f32 %v512, %v569
        %v584 = vsub.f32 %v517, %v576
        %v585 = vmul.f32 %v577, 1.442695
        %v586 = vpow.pop %v585
        %v587 = vmul.f32 %v578, 1.442695
        %v588 = vpow.pop %v587
        %v589 = vmul.f32 %v579, 1.442695
        %v590 = vpow.pop %v589
        %v591 = vmul.f32 %v580, 1.442695
        %v592 = vpow.pop %v591
        %v593 = vmul.f32 %v581, 1.442695
        %v594 = vpow.pop %v593
        %v595 = vmul.f32 %v582, 1.442695
        %v596 = vpow.pop %v595
        %v597 = vmul.f32 %v583, 1.442695
        %v598 = vpow.pop %v597
        %v599 = vmul.f32 %v584, 1.442695
        %v600 = vpow.pop %v599
        %v601 = vsel %vm520, %v586, 0.0
        %v602 = vrot.slane %v601, 4
        %v603 = vadd.f32 %v601, %v602
        %v604 = vrot.slane %v603, 2
        %v605 = vadd.f32 %v603, %v604
        %v606 = vrot.slane %v605, 1
        %v607 = vadd.f32 %v605, %v606
        %v608 = vsel %vm520, %v588, 0.0
        %v609 = vrot.slane %v608, 4
        %v610 = vadd.f32 %v608, %v609
        %v611 = vrot.slane %v610, 2
        %v612 = vadd.f32 %v610, %v611
        %v613 = vrot.slane %v612, 1
        %v614 = vadd.f32 %v612, %v613
        %v615 = vsel %vm520, %v590, 0.0
        %v616 = vrot.slane %v615, 4
        %v617 = vadd.f32 %v615, %v616
        %v618 = vrot.slane %v617, 2
        %v619 = vadd.f32 %v617, %v618
        %v620 = vrot.slane %v619, 1
        %v621 = vadd.f32 %v619, %v620
        %v622 = vsel %vm520, %v592, 0.0
        %v623 = vrot.slane %v622, 4
        %v624 = vadd.f32 %v622, %v623
        %v625 = vrot.slane %v624, 2
        %v626 = vadd.f32 %v624, %v625
        %v627 = vrot.slane %v626, 1
        %v628 = vadd.f32 %v626, %v627
        %v629 = vsel %vm520, %v594, 0.0
        %v630 = vrot.slane %v629, 4
        %v631 = vadd.f32 %v629, %v630
        %v632 = vrot.slane %v631, 2
        %v633 = vadd.f32 %v631, %v632
        %v634 = vrot.slane %v633, 1
        %v635 = vadd.f32 %v633, %v634
        %v636 = vsel %vm520, %v596, 0.0
        %v637 = vrot.slane %v636, 4
        %v638 = vadd.f32 %v636, %v637
        %v639 = vrot.slane %v638, 2
        %v640 = vadd.f32 %v638, %v639
        %v641 = vrot.slane %v640, 1
        %v642 = vadd.f32 %v640, %v641
        %v643 = vsel %vm520, %v598, 0.0
        %v644 = vrot.slane %v643, 4
        %v645 = vadd.f32 %v643, %v644
        %v646 = vrot.slane %v645, 2
        %v647 = vadd.f32 %v645, %v646
        %v648 = vrot.slane %v647, 1
        %v649 = vadd.f32 %v647, %v648
        %v650 = vsel %vm520, %v600, 0.0
        %v651 = vrot.slane %v650, 4
        %v652 = vadd.f32 %v650, %v651
        %v653 = vrot.slane %v652, 2
        %v654 = vadd.f32 %v652, %v653
        %v655 = vrot.slane %v654, 1
        %v656 = vadd.f32 %v654, %v655
        %v657 = vrcp.pop %v607
        %v658 = vrcp.pop %v614
        %v659 = vrcp.pop %v621
        %v660 = vrcp.pop %v628
        %v661 = vrcp.pop %v635
        %v662 = vrcp.pop %v642
        %v663 = vrcp.pop %v649
        %v664 = vrcp.pop %v656
        %v665 = vmul.f32 %v586, %v657
        %v666 = vmul.f32 %v588, %v658
        %v667 = vmul.f32 %v590, %v659
        %v668 = vmul.f32 %v592, %v660
        %v669 = vmul.f32 %v594, %v661
        %v670 = vmul.f32 %v596, %v662
        %v671 = vmul.f32 %v598, %v663
        %v672 = vmul.f32 %v600, %v664
        %v673 = vld [vmem:[%s2] sm:$0xf]
        %682 = vrot.lane.b32.xlu0 %v665, 96
        %v683 = vpop.permute.xlu0 %682
        %684 = vrot.lane.b32.xlu0 %v666, 96
        %v685 = vpop.permute.xlu0 %684
        %686 = vrot.lane.b32.xlu0 %v667, 96
        %v687 = vpop.permute.xlu0 %686
        %688 = vrot.lane.b32.xlu0 %v668, 96
        %v689 = vpop.permute.xlu0 %688
        %690 = vrot.lane.b32.xlu0 %v669, 96
        %v691 = vpop.permute.xlu0 %690
        %692 = vrot.lane.b32.xlu0 %v670, 96
        %v693 = vpop.permute.xlu0 %692
        %694 = vrot.lane.b32.xlu0 %v671, 96
        %v695 = vpop.permute.xlu0 %694
        %696 = vrot.lane.b32.xlu0 %v672, 96
        %v697 = vpop.permute.xlu0 %696
        %vm698 = vcmask 31744
        %v699 = vsel %vm698, %v683, 0
        %v701 = vsel %vm698, %v685, 0
        %v703 = vsel %vm698, %v687, 0
        %v705 = vsel %vm698, %v689, 0
        %v707 = vsel %vm698, %v691, 0
        %v709 = vsel %vm698, %v693, 0
        %v711 = vsel %vm698, %v695, 0
        %v713 = vsel %vm698, %v697, 0
        %vm715 = vcmask 1043456
        %v717 = vsel %vm715, %v673, 0
        %719 = vmatprep.subr.mxu0 0.0
        %720 = vmatpush1.msra.mxu0 %v717
        %721 = vmatprep.subr.mxu0 0.0
        %722 = vmatpush1.msra.mxu0 0.0
        %723 = vmatprep.subr.mxu0 0.0
        %724 = vmatpush1.msra.mxu0 0.0
        %725 = vmatprep.subr.mxu0 0.0
        %726 = vmatpush1.msra.mxu0 0.0
        %727 = vmatprep.subr.mxu0 0.0
        %728 = vmatpush1.msra.mxu0 0.0
        %729 = vmatprep.subr.mxu0 0.0
        %730 = vmatpush1.msra.mxu0 0.0
        %731 = vmatprep.subr.mxu0 0.0
        %732 = vmatpush1.msra.mxu0 0.0
        %733 = vmatprep.subr.mxu0 0.0
        %734 = vmatpush1.msra.mxu0 0.0
        %735 = vmatprep.subr.mxu0 0.0
        %736 = vmatpush1.msra.mxu0 0.0
        %737 = vmatprep.subr.mxu0 0.0
        %738 = vmatpush1.msra.mxu0 0.0
        %739 = vmatprep.subr.mxu0 0.0
        %740 = vmatpush1.msra.mxu0 0.0
        %741 = vmatprep.subr.mxu0 0.0
        %742 = vmatpush1.msra.mxu0 0.0
        %743 = vmatprep.subr.mxu0 0.0
        %744 = vmatpush1.msra.mxu0 0.0
        %745 = vmatprep.subr.mxu0 0.0
        %746 = vmatpush1.msra.mxu0 0.0
        %747 = vmatprep.subr.mxu0 0.0
        %748 = vmatpush1.msra.mxu0 0.0
        %749 = vmatprep.subr.mxu0 0.0
        %750 = vmatpush1.msra.mxu0 0.0
        %751 = vmatprep.subr.mxu0 0.0
        %752 = vmatpush1.msra.mxu0 0.0
        %753 = vmatprep.subr.mxu0 0.0
        %754 = vmatpush1.msra.mxu0 0.0
        %755 = vmatprep.subr.mxu0 0.0
        %756 = vmatpush1.msra.mxu0 0.0
        %757 = vmatprep.subr.mxu0 0.0
        %758 = vmatpush1.msra.mxu0 0.0
        %759 = vmatprep.subr.mxu0 0.0
        %760 = vmatpush1.msra.mxu0 0.0
        %761 = vmatprep.subr.mxu0 0.0
        %762 = vmatpush1.msra.mxu0 0.0
        %763 = vmatprep.subr.mxu0 0.0
        %764 = vmatpush1.msra.mxu0 0.0
        %765 = vmatprep.subr.mxu0 0.0
        %766 = vmatpush1.msra.mxu0 0.0
        %767 = vmatprep.subr.mxu0 0.0
        %768 = vmatpush1.msra.mxu0 0.0
        %769 = vmatprep.subr.mxu0 0.0
        %770 = vmatpush1.msra.mxu0 0.0
        %771 = vmatprep.subr.mxu0 0.0
        %772 = vmatpush1.msra.mxu0 0.0
        %773 = vmatprep.subr.mxu0 0.0
        %774 = vmatpush1.msra.mxu0 0.0
        %775 = vmatprep.subr.mxu0 0.0
        %776 = vmatpush1.msra.mxu0 0.0
        %777 = vmatprep.subr.mxu0 0.0
        %778 = vmatpush1.msra.mxu0 0.0
        %779 = vmatprep.subr.mxu0 0.0
        %780 = vmatpush1.msra.mxu0 0.0
        %781 = vmatprep.subr.mxu0 0.0
        %782 = vmatpush1.msra.mxu0 0.0
        %783 = vmatprep.mubr.f32.mxu0 0.0
        %784 = vmatmul.mubr.f32.gmra.mrb[0].mxu0 %v699
        %v785 = vpop.f32.mrb[0].mxu0
        %v786 = vadd.f32 0.0, %v785
        %v787 = vpop.f32.mrb[0].mxu0
        %788 = vmatprep.mubr.f32.mxu0 0.0
        %789 = vmatmul.mubr.f32.gmra.mrb[0].mxu0 %v701
        %v790 = vpop.f32.mrb[0].mxu0
        %v791 = vadd.f32 0.0, %v790
        %v792 = vpop.f32.mrb[0].mxu0
        %793 = vmatprep.mubr.f32.mxu0 0.0
        %794 = vmatmul.mubr.f32.gmra.mrb[0].mxu0 %v703
        %v795 = vpop.f32.mrb[0].mxu0
        %v796 = vadd.f32 0.0, %v795
        %v797 = vpop.f32.mrb[0].mxu0
        %798 = vmatprep.mubr.f32.mxu0 0.0
        %799 = vmatmul.mubr.f32.gmra.mrb[0].mxu0 %v705
        %v800 = vpop.f32.mrb[0].mxu0
        %v801 = vadd.f32 0.0, %v800
        %v802 = vpop.f32.mrb[0].mxu0
        %803 = vmatprep.mubr.f32.mxu0 0.0
        %804 = vmatmul.mubr.f32.gmra.mrb[0].mxu0 %v707
        %v805 = vpop.f32.mrb[0].mxu0
        %v806 = vadd.f32 0.0, %v805
        %v807 = vpop.f32.mrb[0].mxu0
        %808 = vmatprep.mubr.f32.mxu0 0.0
        %809 = vmatmul.mubr.f32.gmra.mrb[0].mxu0 %v709
        %v810 = vpop.f32.mrb[0].mxu0
        %v811 = vadd.f32 0.0, %v810
        %v812 = vpop.f32.mrb[0].mxu0
        %813 = vmatprep.mubr.f32.mxu0 0.0
        %814 = vmatmul.mubr.f32.gmra.mrb[0].mxu0 %v711
        %v815 = vpop.f32.mrb[0].mxu0
        %v816 = vadd.f32 0.0, %v815
        %v817 = vpop.f32.mrb[0].mxu0
        %818 = vmatprep.mubr.f32.mxu0 0.0
        %819 = vmatmul.mubr.f32.gmra.mrb[0].mxu0 %v713
        %v820 = vpop.f32.mrb[0].mxu0
        %v821 = vadd.f32 0.0, %v820
        %v822 = vpop.f32.mrb[0].mxu0
        %823 = vdwg.mxu0
        %v824 = vmul.f32 %v786, %v482
        %v825 = vmul.f32 %v791, %v487
        %v826 = vmul.f32 %v796, %v492
        %v827 = vmul.f32 %v801, %v497
        %v828 = vmul.f32 %v806, %v502
        %v829 = vmul.f32 %v811, %v507
        %v830 = vmul.f32 %v816, %v512
        %v831 = vmul.f32 %v821, %v517
        %v832 = vsel %vm281, %v824, 0.0
        %v833 = vrot.slane %v832, 4
        %v834 = vadd.f32 %v832, %v833
        %v835 = vrot.slane %v834, 2
        %v836 = vadd.f32 %v834, %v835
        %v837 = vrot.slane %v836, 1
        %v838 = vadd.f32 %v836, %v837
        %v839 = vsel %vm281, %v825, 0.0
        %v840 = vrot.slane %v839, 4
        %v841 = vadd.f32 %v839, %v840
        %v842 = vrot.slane %v841, 2
        %v843 = vadd.f32 %v841, %v842
        %v844 = vrot.slane %v843, 1
        %v845 = vadd.f32 %v843, %v844
        %v846 = vsel %vm281, %v826, 0.0
        %v847 = vrot.slane %v846, 4
        %v848 = vadd.f32 %v846, %v847
        %v849 = vrot.slane %v848, 2
        %v850 = vadd.f32 %v848, %v849
        %v851 = vrot.slane %v850, 1
        %v852 = vadd.f32 %v850, %v851
        %v853 = vsel %vm281, %v827, 0.0
        %v854 = vrot.slane %v853, 4
        %v855 = vadd.f32 %v853, %v854
        %v856 = vrot.slane %v855, 2
        %v857 = vadd.f32 %v855, %v856
        %v858 = vrot.slane %v857, 1
        %v859 = vadd.f32 %v857, %v858
        %v860 = vsel %vm281, %v828, 0.0
        %v861 = vrot.slane %v860, 4
        %v862 = vadd.f32 %v860, %v861
        %v863 = vrot.slane %v862, 2
        %v864 = vadd.f32 %v862, %v863
        %v865 = vrot.slane %v864, 1
        %v866 = vadd.f32 %v864, %v865
        %v867 = vsel %vm281, %v829, 0.0
        %v868 = vrot.slane %v867, 4
        %v869 = vadd.f32 %v867, %v868
        %v870 = vrot.slane %v869, 2
        %v871 = vadd.f32 %v869, %v870
        %v872 = vrot.slane %v871, 1
        %v873 = vadd.f32 %v871, %v872
        %v874 = vsel %vm281, %v830, 0.0
        %v875 = vrot.slane %v874, 4
        %v876 = vadd.f32 %v874, %v875
        %v877 = vrot.slane %v876, 2
        %v878 = vadd.f32 %v876, %v877
        %v879 = vrot.slane %v878, 1
        %v880 = vadd.f32 %v878, %v879
        %v881 = vsel %vm281, %v831, 0.0
        %v882 = vrot.slane %v881, 4
        %v883 = vadd.f32 %v881, %v882
        %v884 = vrot.slane %v883, 2
        %v885 = vadd.f32 %v883, %v884
        %v886 = vrot.slane %v885, 1
        %v887 = vadd.f32 %v885, %v886
        %v888 = vld [vmem:[#allocation7] sm:$0xff]
        %v889 = vld [vmem:[#allocation7 + $0x8] sm:$0xff]
        %v890 = vld [vmem:[#allocation7 + $0x10] sm:$0xff]
        %v891 = vld [vmem:[#allocation7 + $0x18] sm:$0xff]
        %v892 = vld [vmem:[%s4] sm:$0x1]
        %v894 = vlaneseq
        %v895 = vshrl.u32 %v894, 7
        %v896 = vsub.s32 0, %v895
        %v897 = vrot.slane %v892, %v896
        %vm907 = vcmask 1041409
        %v908 = vsel %vm907, %v845, %v838
        %vm909 = vcmask 1042434
        %v910 = vsel %vm909, %v852, %v908
        %vm911 = vcmask 1043459
        %v912 = vsel %vm911, %v859, %v910
        %vm913 = vcmask 1044484
        %v914 = vsel %vm913, %v866, %v912
        %vm915 = vcmask 1045509
        %v916 = vsel %vm915, %v873, %v914
        %vm917 = vcmask 1046534
        %v918 = vsel %vm917, %v880, %v916
        %vm919 = vcmask 1047559
        %v920 = vsel %vm919, %v887, %v918
        %v921 = vsel %vm281, %v920, 0
        %923 = vmatprep.subr.mxu0 0.0
        %924 = vmatpush1.msra.mxu0 %v888
        %925 = vmatprep.subr.mxu0 0.0
        %926 = vmatpush1.msra.mxu0 %v889
        %927 = vmatprep.subr.mxu0 0.0
        %928 = vmatpush1.msra.mxu0 %v890
        %929 = vmatprep.subr.mxu0 0.0
        %930 = vmatpush1.msra.mxu0 %v891
        %931 = vmatprep.subr.mxu0 0.0
        %932 = vmatpush1.msra.mxu0 0.0
        %933 = vmatprep.subr.mxu0 0.0
        %934 = vmatpush1.msra.mxu0 0.0
        %935 = vmatprep.subr.mxu0 0.0
        %936 = vmatpush1.msra.mxu0 0.0
        %937 = vmatprep.subr.mxu0 0.0
        %938 = vmatpush1.msra.mxu0 0.0
        %939 = vmatprep.subr.mxu0 0.0
        %940 = vmatpush1.msra.mxu0 0.0
        %941 = vmatprep.subr.mxu0 0.0
        %942 = vmatpush1.msra.mxu0 0.0
        %943 = vmatprep.subr.mxu0 0.0
        %944 = vmatpush1.msra.mxu0 0.0
        %945 = vmatprep.subr.mxu0 0.0
        %946 = vmatpush1.msra.mxu0 0.0
        %947 = vmatprep.subr.mxu0 0.0
        %948 = vmatpush1.msra.mxu0 0.0
        %949 = vmatprep.subr.mxu0 0.0
        %950 = vmatpush1.msra.mxu0 0.0
        %951 = vmatprep.subr.mxu0 0.0
        %952 = vmatpush1.msra.mxu0 0.0
        %953 = vmatprep.subr.mxu0 0.0
        %954 = vmatpush1.msra.mxu0 0.0
        %955 = vmatprep.subr.mxu0 0.0
        %956 = vmatpush1.msra.mxu0 0.0
        %957 = vmatprep.subr.mxu0 0.0
        %958 = vmatpush1.msra.mxu0 0.0
        %959 = vmatprep.subr.mxu0 0.0
        %960 = vmatpush1.msra.mxu0 0.0
        %961 = vmatprep.subr.mxu0 0.0
        %962 = vmatpush1.msra.mxu0 0.0
        %963 = vmatprep.subr.mxu0 0.0
        %964 = vmatpush1.msra.mxu0 0.0
        %965 = vmatprep.subr.mxu0 0.0
        %966 = vmatpush1.msra.mxu0 0.0
        %967 = vmatprep.subr.mxu0 0.0
        %968 = vmatpush1.msra.mxu0 0.0
        %969 = vmatprep.subr.mxu0 0.0
        %970 = vmatpush1.msra.mxu0 0.0
        %971 = vmatprep.subr.mxu0 0.0
        %972 = vmatpush1.msra.mxu0 0.0
        %973 = vmatprep.subr.mxu0 0.0
        %974 = vmatpush1.msra.mxu0 0.0
        %975 = vmatprep.subr.mxu0 0.0
        %976 = vmatpush1.msra.mxu0 0.0
        %977 = vmatprep.subr.mxu0 0.0
        %978 = vmatpush1.msra.mxu0 0.0
        %979 = vmatprep.subr.mxu0 0.0
        %980 = vmatpush1.msra.mxu0 0.0
        %981 = vmatprep.subr.mxu0 0.0
        %982 = vmatpush1.msra.mxu0 0.0
        %983 = vmatprep.subr.mxu0 0.0
        %984 = vmatpush1.msra.mxu0 0.0
        %985 = vmatprep.subr.mxu0 0.0
        %986 = vmatpush1.msra.mxu0 0.0
        %987 = vmatprep.mubr.f32.mxu0 0.0
        %988 = vmatmul.mubr.f32.gmra.mrb[0].mxu0 %v921
        %v989 = vpop.f32.mrb[0].mxu0
        %v990 = vadd.f32 %v897, %v989
        %v991 = vpop.f32.mrb[0].mxu0
        %992 = vdwg.mxu0
        %993 = vst.msk [vmem:[%s271] sm:$0xff] %vm281, %v990
        %s994 = sand.u32 %s141, 1
        %s995 = scalar_lea.sflag [#allocation4], %s994
        %s996 = sand.u32 %s141, 1
        %s997 = smul.addr %s996, 8
        %s998 = scalar_lea.vmem [#allocation8], %s997
        // Predicated region
        $region53: #{tpu_custom_call.1} parent=39 // pred_check
          %p999 = pneg %p151
        $region54: #{tpu_custom_call.1} parent=39 // pred_check_branch
          %1001 = sbr.rel (%p999) target = $region56
        $region55: #{tpu_custom_call.1} parent=39 // pred_region
          %s1003 = ssub.s32 128, 128
          %1004 = vsyncadd %s995, %s1003
          %s1005 = smul.addr %s23, 128
          %s1006 = scalar_lea.hbm %s5, %s1005
          %s1008 = sshll.u32 %s998, 4
          %s1009 = int_to_ptr.vmem [resolvable:$true] %s1008
          %1011 = dma.vmem_to_hbm [thread:$0]  %s1009, 128, %s1006, %s995
        $region56: #{tpu_custom_call.1} parent=39 // pred_fallthru
          _
      $region40: #{tpu_custom_call.1} parent=5 // pred_fallthru
        _
      %p1012 = scmp.le.s32.totalorder 2, %s18
      // Predicated region
      $region57: #{tpu_custom_call.1} parent=5 // pred_check
        %p1013 = pneg %p1012
      $region58: #{tpu_custom_call.1} parent=5 // pred_check_branch
        %1015 = sbr.rel (%p1013) target = $region60
      $region59: #{tpu_custom_call.1} parent=5 // pred_region
        %s1016 = ssub.s32 %s18, 2
        // Predicated region
        $region61: #{tpu_custom_call.1} parent=59 // pred_check
          %p1017 = pneg %p157
        $region62: #{tpu_custom_call.1} parent=59 // pred_check_branch
          %1019 = sbr.rel (%p1017) target = $region64
        $region63: #{tpu_custom_call.1} parent=59 // pred_region
          %s1020 = sand.u32 %s142, 1
          %s1021 = scalar_lea.sflag [#allocation4], %s1020
          %s1022 = sand.u32 %s142, 1
          %s1023 = smul.addr %s1022, 8
          %s1024 = scalar_lea.vmem [#allocation8], %s1023
          %1025 = dma.done %s1021, 128
        $region64: #{tpu_custom_call.1} parent=59 // pred_fallthru
          _
      $region60: #{tpu_custom_call.1} parent=5 // pred_fallthru
        _
    $region6: #{tpu_custom_call.1} parent=1 // loop_footer
      %s22 = sadd.s32 1, %s18
    $region7: #{tpu_custom_call.1} parent=1 // loop_footer_branch
      %17 = sbr.rel target = $region3
    $region8: #{tpu_custom_call.1} parent=1 // loop_exit
      _
    %1026 = vsyncpa [#allocation3], 1
    %s1027 = scalar_lea.sflag [#allocation3], 1
    %1028 = vsyncpa %s1027, 1
    %1029 = vsyncpa [#allocation6], 1
    %1030 = vsyncpa [#allocation4], 1
    %s1031 = scalar_lea.sflag [#allocation4], 1
    %1032 = vsyncpa %s1031, 1

</llo_original>
